<compile_context>
chip_gen: v7x
topology: tpu7x:2x2x1
jax: 0.10.0
libtpu: 0.0.40
codegen_flags: <defaults>
</compile_context>

<pallas_src>
import functools

import jax
import jax.numpy as jnp
from jax.experimental import pallas as pl
from jax.experimental.pallas import tpu as pltpu


MAX_REL_POS = 20  # module default


def _round_up(x: int, m: int) -> int:
    return ((x + m - 1) // m) * m


def _rel_pos_kernel(table_ref, o_ref, *, tm, tn, max_rel_pos):
    """Compute one (tm, tn) tile of the relative-position bias matrix.

    table_ref: SMEM ref (scalar-prefetched), shape (max_rel_pos + 1,), f32.
    o_ref:     VMEM ref, shape (tm, tn), output tile.
    """
    m = max_rel_pos
    i0 = pl.program_id(0) * tm          # global row offset of this tile
    j0 = pl.program_id(1) * tn          # global col offset of this tile
    d = i0 - j0                         # diff (i - j) at the tile origin
    sat = table_ref[m]                  # saturation value table[max_rel_pos]

    # 1) Unconditional saturated constant fill of the whole tile: pure store
    #    bandwidth, unmasked full-lane stores (tn is a multiple of 128).
    o_ref[...] = jnp.full((tm, tn), sat, dtype=o_ref.dtype)

    # Diffs i - j inside this tile span [d - (tn - 1), d + (tm - 1)].
    in_band = jnp.logical_and(d - (tn - 1) <= m, d + (tm - 1) >= -m)

    @pl.when(in_band)
    def _():
        # 2) Near-diagonal tile: run the gather (as a vectorized select chain)
        #    only on the 128-lane column stripes that intersect the band.
        #    ~ceil((tm + 2m)/128)+1 stripes execute per band tile; the rest of
        #    the tn//128 stripes are skipped by pl.when at runtime.
        # TODO(synk): the Toeplitz structure (value depends only on i - j)
        # could be exploited further with a 1-D profile + pltpu.roll to move
        # this work off the VALU onto the XLU; the stripe window already keeps
        # band tiles roughly DMA-bound at the default tile size.
        vals = [table_ref[k] for k in range(m)]        # hoisted scalar reads
        row = jax.lax.broadcasted_iota(jnp.int32, (tm, 1), 0) + i0

        for s in range(tn // 128):
            lo = 128 * s                                # static stripe offset
            # Stripe covers global cols [j0+lo, j0+lo+127]; diffs in it span
            # [d - lo - 127, d + tm - 1 - lo]; intersect [-m, m]?
            stripe_hit = jnp.logical_and(d - (lo + 127) <= m,
                                         d + (tm - 1) - lo >= -m)

            @pl.when(stripe_hit)
            def _(lo=lo):
                col = (jax.lax.broadcasted_iota(jnp.int32, (1, 128), 1)
                       + (j0 + lo))
                idx = jnp.minimum(jnp.abs(row - col), m)
                out = jnp.full((tm, 128), sat, dtype=jnp.float32)
                for k in range(m):
                    out = jnp.where(idx == k, vals[k], out)
                o_ref[:, lo:lo + 128] = out.astype(o_ref.dtype)


def relative_position_bias(seq_len: int, emb_table: jax.Array,
                           max_rel_pos: int = MAX_REL_POS, *,
                           tm: int = 512, tn: int = 2048,
                           out_dtype=jnp.float32) -> jax.Array:
    """Pallas equivalent of RelativePositionEncoder.forward(seq_len, device).

    emb_table: (max_rel_pos + 1, 1) or (max_rel_pos + 1,) float32 embedding weights.
    Returns:   (seq_len, seq_len) bias matrix (out_dtype, default float32).
    """
    table = jnp.asarray(emb_table, jnp.float32).reshape(-1)
    assert table.shape[0] == max_rel_pos + 1

    itemsize = jnp.dtype(out_dtype).itemsize
    sub = 16 if itemsize == 2 else 8     # sublane tile for the store dtype

    # Clamp tile sizes for short sequences, keeping sublane/lane alignment so
    # blocks satisfy the hardware tiling constraint and stores stay unmasked.
    tm = max(sub, min(tm, _round_up(seq_len, sub)))
    tn = max(128, min(tn, _round_up(seq_len, 128)))
    assert tm % sub == 0 and tn % 128 == 0

    # Exact output shape; Pallas masks ragged edge blocks on writeback
    # (no padded allocation, no wrapper slice / extra HBM copy).
    grid = (pl.cdiv(seq_len, tm), pl.cdiv(seq_len, tn))

    block_bytes = tm * tn * itemsize
    # Double-buffered output block + headroom; explicit so big tiles are legal
    # on every generation, capped at v7x physical VMEM (64 MiB / TC).
    vmem_limit = int(min(64 << 20, max(32 << 20, 2 * block_bytes + (4 << 20))))

    kernel = functools.partial(_rel_pos_kernel, tm=tm, tn=tn,
                               max_rel_pos=max_rel_pos)

    return pl.pallas_call(
        kernel,
        out_shape=jax.ShapeDtypeStruct((seq_len, seq_len), out_dtype),
        grid_spec=pltpu.PrefetchScalarGridSpec(
            num_scalar_prefetch=1,            # table -> SMEM once, before grid
            grid=grid,
            in_specs=[],
            out_specs=pl.BlockSpec((tm, tn), lambda i, j, _table: (i, j)),
        ),
        compiler_params=pltpu.CompilerParams(
            dimension_semantics=("parallel", "parallel"),
            vmem_limit_bytes=vmem_limit),
        cost_estimate=pl.CostEstimate(
            flops=0, transcendentals=0,
            bytes_accessed=seq_len * seq_len * itemsize),
    )(table)


def _reference(seq_len: int, table: jax.Array, max_rel_pos: int = MAX_REL_POS):
    """Plain-JAX reference mirroring the PyTorch forward."""
    t = jnp.asarray(table, jnp.float32).reshape(-1)
    pos = jnp.arange(seq_len)
    rel = jnp.clip(jnp.abs(pos[:, None] - pos[None, :]), 0, max_rel_pos)
    return t[rel]


if __name__ == "__main__":
    key = jax.random.PRNGKey(0)
    # nn.Embedding(max_rel_pos + 1, 1) weights ~ N(0, 1); deterministic init.
    emb_table = jax.random.normal(key, (MAX_REL_POS + 1, 1), dtype=jnp.float32)

    # Small cases exercising: single tiny tile, multi-tile ragged grid with
    # both band and off-band tiles, a case where only a subset of the 128-lane
    # stripes run (tn > band window), and the bf16 store path.
    cases = [
        dict(seq_len=8),                                            # defaults clamp to (8,128)
        dict(seq_len=300, tm=64, tn=128),                           # 5x3 grid, ragged edges
        dict(seq_len=300, tm=64, tn=512),                           # band narrower than tile
        dict(seq_len=256, tm=64, tn=128, out_dtype=jnp.bfloat16),   # bf16 output
    ]
    for c in cases:
        seq_len = c.pop("seq_len")
        out_dtype = c.get("out_dtype", jnp.float32)
        out = relative_position_bias(seq_len, emb_table, **c)
        out = jax.block_until_ready(out)
        ref = _reference(seq_len, emb_table).astype(out_dtype)
        assert out.shape == (seq_len, seq_len), out.shape
        assert out.dtype == jnp.dtype(out_dtype), out.dtype
        assert jnp.allclose(out.astype(jnp.float32), ref.astype(jnp.float32),
                            atol=1e-6, rtol=1e-6), f"mismatch for seq_len={seq_len}"

    print("KERNEL_OK")
</pallas_src>

<mosaic_0001>
module attributes {stable_mosaic.version = 11 : i64} {
  func.func @_rel_pos_kernel(%arg0: i32, %arg1: i32, %arg2: memref<21xf32, #tpu.memory_space<smem>>, %arg3: memref<8x128xf32, #tpu.memory_space<vmem>>) attributes {dimension_semantics = [#tpu.dimension_semantics<parallel>, #tpu.dimension_semantics<parallel>], iteration_bounds = array<i64: 1, 1>, scalar_prefetch = 1 : i64, scratch_operands = 0 : i64, tpu.core_type = #tpu.core_type<tc>, window_params = [{transform_indices = @transform_0, window_bounds = array<i64: 8, 128>}]} {
    %c8_i32 = arith.constant 8 : i32
    %0 = arith.muli %arg0, %c8_i32 : i32
    %c128_i32 = arith.constant 128 : i32
    %1 = arith.muli %arg1, %c128_i32 : i32
    %2 = arith.subi %0, %1 : i32
    %c20 = arith.constant 20 : index
    %3 = memref.load %arg2[%c20] : memref<21xf32, #tpu.memory_space<smem>>
    %4 = vector.broadcast %3 : f32 to vector<8x128xf32>
    %c0 = arith.constant 0 : index
    %c0_0 = arith.constant 0 : index
    %5 = vector.load %arg3[%c0, %c0_0] : memref<8x128xf32, #tpu.memory_space<vmem>>, vector<8x128xf32>
    tpu.vector_store %arg3[%c0, %c0_0], %4 {strides = array<i32>} : memref<8x128xf32, #tpu.memory_space<vmem>>, vector<8x128xf32>,
    %c127_i32 = arith.constant 127 : i32
    %6 = arith.subi %2, %c127_i32 : i32
    %c20_i32 = arith.constant 20 : i32
    %7 = arith.cmpi sle, %6, %c20_i32 : i32
    %c7_i32 = arith.constant 7 : i32
    %8 = arith.addi %2, %c7_i32 : i32
    %c-20_i32 = arith.constant -20 : i32
    %9 = arith.cmpi sge, %8, %c-20_i32 : i32
    %10 = arith.andi %7, %9 : i1
    %11 = arith.extui %10 : i1 to i32
    %c0_i32 = arith.constant 0 : i32
    %12 = arith.cmpi ne, %11, %c0_i32 : i32
    scf.if %12 {
      %c0_1 = arith.constant 0 : index
      %13 = memref.load %arg2[%c0_1] : memref<21xf32, #tpu.memory_space<smem>>
      %c1 = arith.constant 1 : index
      %14 = memref.load %arg2[%c1] : memref<21xf32, #tpu.memory_space<smem>>
      %c2 = arith.constant 2 : index
      %15 = memref.load %arg2[%c2] : memref<21xf32, #tpu.memory_space<smem>>
      %c3 = arith.constant 3 : index
      %16 = memref.load %arg2[%c3] : memref<21xf32, #tpu.memory_space<smem>>
      %c4 = arith.constant 4 : index
      %17 = memref.load %arg2[%c4] : memref<21xf32, #tpu.memory_space<smem>>
      %c5 = arith.constant 5 : index
      %18 = memref.load %arg2[%c5] : memref<21xf32, #tpu.memory_space<smem>>
      %c6 = arith.constant 6 : index
      %19 = memref.load %arg2[%c6] : memref<21xf32, #tpu.memory_space<smem>>
      %c7 = arith.constant 7 : index
      %20 = memref.load %arg2[%c7] : memref<21xf32, #tpu.memory_space<smem>>
      %c8 = arith.constant 8 : index
      %21 = memref.load %arg2[%c8] : memref<21xf32, #tpu.memory_space<smem>>
      %c9 = arith.constant 9 : index
      %22 = memref.load %arg2[%c9] : memref<21xf32, #tpu.memory_space<smem>>
      %c10 = arith.constant 10 : index
      %23 = memref.load %arg2[%c10] : memref<21xf32, #tpu.memory_space<smem>>
      %c11 = arith.constant 11 : index
      %24 = memref.load %arg2[%c11] : memref<21xf32, #tpu.memory_space<smem>>
      %c12 = arith.constant 12 : index
      %25 = memref.load %arg2[%c12] : memref<21xf32, #tpu.memory_space<smem>>
      %c13 = arith.constant 13 : index
      %26 = memref.load %arg2[%c13] : memref<21xf32, #tpu.memory_space<smem>>
      %c14 = arith.constant 14 : index
      %27 = memref.load %arg2[%c14] : memref<21xf32, #tpu.memory_space<smem>>
      %c15 = arith.constant 15 : index
      %28 = memref.load %arg2[%c15] : memref<21xf32, #tpu.memory_space<smem>>
      %c16 = arith.constant 16 : index
      %29 = memref.load %arg2[%c16] : memref<21xf32, #tpu.memory_space<smem>>
      %c17 = arith.constant 17 : index
      %30 = memref.load %arg2[%c17] : memref<21xf32, #tpu.memory_space<smem>>
      %c18 = arith.constant 18 : index
      %31 = memref.load %arg2[%c18] : memref<21xf32, #tpu.memory_space<smem>>
      %c19 = arith.constant 19 : index
      %32 = memref.load %arg2[%c19] : memref<21xf32, #tpu.memory_space<smem>>
      %33 = tpu.iota {dimensions = array<i32: 0>} : vector<8x1xi32>
      %34 = vector.broadcast %0 : i32 to vector<8x1xi32>
      %35 = arith.addi %33, %34 : vector<8x1xi32>
      %c127_i32_2 = arith.constant 127 : i32
      %36 = arith.subi %2, %c127_i32_2 : i32
      %c20_i32_3 = arith.constant 20 : i32
      %37 = arith.cmpi sle, %36, %c20_i32_3 : i32
      %c7_i32_4 = arith.constant 7 : i32
      %38 = arith.addi %2, %c7_i32_4 : i32
      %c0_i32_5 = arith.constant 0 : i32
      %39 = arith.subi %38, %c0_i32_5 : i32
      %c-20_i32_6 = arith.constant -20 : i32
      %40 = arith.cmpi sge, %39, %c-20_i32_6 : i32
      %41 = arith.andi %37, %40 : i1
      %42 = arith.extui %41 : i1 to i32
      %c0_i32_7 = arith.constant 0 : i32
      %43 = arith.cmpi ne, %42, %c0_i32_7 : i32
      scf.if %43 {
        %44 = tpu.iota {dimensions = array<i32: 1>} : vector<1x128xi32>
        %c0_i32_8 = arith.constant 0 : i32
        %45 = arith.addi %1, %c0_i32_8 : i32
        %46 = vector.broadcast %45 : i32 to vector<1x128xi32>
        %47 = arith.addi %44, %46 : vector<1x128xi32>
        %48 = vector.broadcast %35 : vector<8x1xi32> to vector<8x128xi32>
        %49 = vector.broadcast %47 : vector<1x128xi32> to vector<8x128xi32>
        %50 = arith.subi %48, %49 : vector<8x128xi32>
        %51 = math.absi %50 : vector<8x128xi32>
        %c20_i32_9 = arith.constant 20 : i32
        %52 = vector.broadcast %c20_i32_9 : i32 to vector<8x128xi32>
        %53 = arith.minsi %51, %52 : vector<8x128xi32>
        %54 = vector.broadcast %3 : f32 to vector<8x128xf32>
        %c0_i32_10 = arith.constant 0 : i32
        %55 = vector.broadcast %c0_i32_10 : i32 to vector<8x128xi32>
        %56 = arith.cmpi eq, %53, %55 : vector<8x128xi32>
        %57 = vector.broadcast %13 : f32 to vector<8x128xf32>
        %58 = arith.select %56, %57, %54 : vector<8x128xi1>, vector<8x128xf32>
        %c1_i32 = arith.constant 1 : i32
        %59 = vector.broadcast %c1_i32 : i32 to vector<8x128xi32>
        %60 = arith.cmpi eq, %53, %59 : vector<8x128xi32>
        %61 = vector.broadcast %14 : f32 to vector<8x128xf32>
        %62 = arith.select %60, %61, %58 : vector<8x128xi1>, vector<8x128xf32>
        %c2_i32 = arith.constant 2 : i32
        %63 = vector.broadcast %c2_i32 : i32 to vector<8x128xi32>
        %64 = arith.cmpi eq, %53, %63 : vector<8x128xi32>
        %65 = vector.broadcast %15 : f32 to vector<8x128xf32>
        %66 = arith.select %64, %65, %62 : vector<8x128xi1>, vector<8x128xf32>
        %c3_i32 = arith.constant 3 : i32
        %67 = vector.broadcast %c3_i32 : i32 to vector<8x128xi32>
        %68 = arith.cmpi eq, %53, %67 : vector<8x128xi32>
        %69 = vector.broadcast %16 : f32 to vector<8x128xf32>
        %70 = arith.select %68, %69, %66 : vector<8x128xi1>, vector<8x128xf32>
        %c4_i32 = arith.constant 4 : i32
        %71 = vector.broadcast %c4_i32 : i32 to vector<8x128xi32>
        %72 = arith.cmpi eq, %53, %71 : vector<8x128xi32>
        %73 = vector.broadcast %17 : f32 to vector<8x128xf32>
        %74 = arith.select %72, %73, %70 : vector<8x128xi1>, vector<8x128xf32>
        %c5_i32 = arith.constant 5 : i32
        %75 = vector.broadcast %c5_i32 : i32 to vector<8x128xi32>
        %76 = arith.cmpi eq, %53, %75 : vector<8x128xi32>
        %77 = vector.broadcast %18 : f32 to vector<8x128xf32>
        %78 = arith.select %76, %77, %74 : vector<8x128xi1>, vector<8x128xf32>
        %c6_i32 = arith.constant 6 : i32
        %79 = vector.broadcast %c6_i32 : i32 to vector<8x128xi32>
        %80 = arith.cmpi eq, %53, %79 : vector<8x128xi32>
        %81 = vector.broadcast %19 : f32 to vector<8x128xf32>
        %82 = arith.select %80, %81, %78 : vector<8x128xi1>, vector<8x128xf32>
        %c7_i32_11 = arith.constant 7 : i32
        %83 = vector.broadcast %c7_i32_11 : i32 to vector<8x128xi32>
        %84 = arith.cmpi eq, %53, %83 : vector<8x128xi32>
        %85 = vector.broadcast %20 : f32 to vector<8x128xf32>
        %86 = arith.select %84, %85, %82 : vector<8x128xi1>, vector<8x128xf32>
        %c8_i32_12 = arith.constant 8 : i32
        %87 = vector.broadcast %c8_i32_12 : i32 to vector<8x128xi32>
        %88 = arith.cmpi eq, %53, %87 : vector<8x128xi32>
        %89 = vector.broadcast %21 : f32 to vector<8x128xf32>
        %90 = arith.select %88, %89, %86 : vector<8x128xi1>, vector<8x128xf32>
        %c9_i32 = arith.constant 9 : i32
        %91 = vector.broadcast %c9_i32 : i32 to vector<8x128xi32>
        %92 = arith.cmpi eq, %53, %91 : vector<8x128xi32>
        %93 = vector.broadcast %22 : f32 to vector<8x128xf32>
        %94 = arith.select %92, %93, %90 : vector<8x128xi1>, vector<8x128xf32>
        %c10_i32 = arith.constant 10 : i32
        %95 = vector.broadcast %c10_i32 : i32 to vector<8x128xi32>
        %96 = arith.cmpi eq, %53, %95 : vector<8x128xi32>
        %97 = vector.broadcast %23 : f32 to vector<8x128xf32>
        %98 = arith.select %96, %97, %94 : vector<8x128xi1>, vector<8x128xf32>
        %c11_i32 = arith.constant 11 : i32
        %99 = vector.broadcast %c11_i32 : i32 to vector<8x128xi32>
        %100 = arith.cmpi eq, %53, %99 : vector<8x128xi32>
        %101 = vector.broadcast %24 : f32 to vector<8x128xf32>
        %102 = arith.select %100, %101, %98 : vector<8x128xi1>, vector<8x128xf32>
        %c12_i32 = arith.constant 12 : i32
        %103 = vector.broadcast %c12_i32 : i32 to vector<8x128xi32>
        %104 = arith.cmpi eq, %53, %103 : vector<8x128xi32>
        %105 = vector.broadcast %25 : f32 to vector<8x128xf32>
        %106 = arith.select %104, %105, %102 : vector<8x128xi1>, vector<8x128xf32>
        %c13_i32 = arith.constant 13 : i32
        %107 = vector.broadcast %c13_i32 : i32 to vector<8x128xi32>
        %108 = arith.cmpi eq, %53, %107 : vector<8x128xi32>
        %109 = vector.broadcast %26 : f32 to vector<8x128xf32>
        %110 = arith.select %108, %109, %106 : vector<8x128xi1>, vector<8x128xf32>
        %c14_i32 = arith.constant 14 : i32
        %111 = vector.broadcast %c14_i32 : i32 to vector<8x128xi32>
        %112 = arith.cmpi eq, %53, %111 : vector<8x128xi32>
        %113 = vector.broadcast %27 : f32 to vector<8x128xf32>
        %114 = arith.select %112, %113, %110 : vector<8x128xi1>, vector<8x128xf32>
        %c15_i32 = arith.constant 15 : i32
        %115 = vector.broadcast %c15_i32 : i32 to vector<8x128xi32>
        %116 = arith.cmpi eq, %53, %115 : vector<8x128xi32>
        %117 = vector.broadcast %28 : f32 to vector<8x128xf32>
        %118 = arith.select %116, %117, %114 : vector<8x128xi1>, vector<8x128xf32>
        %c16_i32 = arith.constant 16 : i32
        %119 = vector.broadcast %c16_i32 : i32 to vector<8x128xi32>
        %120 = arith.cmpi eq, %53, %119 : vector<8x128xi32>
        %121 = vector.broadcast %29 : f32 to vector<8x128xf32>
        %122 = arith.select %120, %121, %118 : vector<8x128xi1>, vector<8x128xf32>
        %c17_i32 = arith.constant 17 : i32
        %123 = vector.broadcast %c17_i32 : i32 to vector<8x128xi32>
        %124 = arith.cmpi eq, %53, %123 : vector<8x128xi32>
        %125 = vector.broadcast %30 : f32 to vector<8x128xf32>
        %126 = arith.select %124, %125, %122 : vector<8x128xi1>, vector<8x128xf32>
        %c18_i32 = arith.constant 18 : i32
        %127 = vector.broadcast %c18_i32 : i32 to vector<8x128xi32>
        %128 = arith.cmpi eq, %53, %127 : vector<8x128xi32>
        %129 = vector.broadcast %31 : f32 to vector<8x128xf32>
        %130 = arith.select %128, %129, %126 : vector<8x128xi1>, vector<8x128xf32>
        %c19_i32 = arith.constant 19 : i32
        %131 = vector.broadcast %c19_i32 : i32 to vector<8x128xi32>
        %132 = arith.cmpi eq, %53, %131 : vector<8x128xi32>
        %133 = vector.broadcast %32 : f32 to vector<8x128xf32>
        %134 = arith.select %132, %133, %130 : vector<8x128xi1>, vector<8x128xf32>
        %c0_13 = arith.constant 0 : index
        %c0_14 = arith.constant 0 : index
        %135 = vector.load %arg3[%c0_13, %c0_14] : memref<8x128xf32, #tpu.memory_space<vmem>>, vector<8x128xf32>
        tpu.vector_store %arg3[%c0_13, %c0_14], %134 {strides = array<i32>} : memref<8x128xf32, #tpu.memory_space<vmem>>, vector<8x128xf32>,
      } else {
      }
    } else {
    }
    return
  }
  func.func @transform_0(%arg0: i32, %arg1: i32, %arg2: memref<21xf32, #tpu.memory_space<smem>>) -> (i32, i32) {
    %c0_i32 = arith.constant 0 : i32
    return %arg0, %arg1 : i32, i32
  }
}

</mosaic_0001>

<llo_original>
// kernel: tpu_custom_call.1
$region0: #{tpu_custom_call.1}
  #allocation0 [shape = 'u32[]', space=smem, size = 0x4, offset = 0x4, fixed_abs, tag = 'smem constant byte address 0x4 - core index']
  #allocation1 [shape = 'u32[144,128]{1,0:T(1,128)}', space=vmem, size = 0x12000, scoped, tag = 'internal scratch']
  #allocation2 [shape = 's32[1]{0}', space=sflag, size = 0x4, scoped, tag = 'scoped memory for tpu_custom_call.1']
  #allocation3 [shape = 'u8[512]{0}', space=smem, size = 0x200, scoped, tag = 'prefetched SMEM operand 0']
  %s0 = inlined_call_operand.hbm [shape: f32[21], index: 0, kind: input, shape index: {}]
  %s1 = inlined_call_operand.hbm [shape: f32[8,8], index: 1, kind: output, shape index: {}]
  %s2 = sld [smem:[#allocation0]]
  $region14: #{tpu_custom_call.1} parent=0
    _
  %s4 = ssub.s32 1, %s2
  %s5 = scalar_select 0, %s4, %s2
  %7 = dma.hbm_to_smem %s0, 16, [#allocation3], [#allocation2]
  %8 = dma.done [#allocation2], 16
  %9 = sfence
  $region1: #{tpu_custom_call.1} parent=0
    #allocation4 [shape = 'u8[4096]{0}', space=vmem, size = 0x1000, scoped, tag = 'output window, operand 0, single buffered']
    #allocation5 [shape = 's32[1]{0}', space=sflag, size = 0x4, scoped, tag = 'scoped memory for tpu_custom_call.1']
    %10 = vsyncpa [#allocation5], 0
    %s11 = smul.u32 0, 8
    %s12 = smul.u32 0, 128
    %s13 = ssub.s32 %s11, %s12
    %s14 = sld [smem:[#allocation3 + $0x14]]
    %v15 = vstv %s14
    %16 = vst [vmem:[#allocation4] sm:$0xff] %v15
    %s17 = ssub.s32 %s13, 127
    %p18 = scmp.le.s32.totalorder %s17, 20
    %s19 = sadd.s32 %s13, 7
    %p20 = scmp.ge.s32.totalorder %s19, 4294967276
    %p21 = pnand %p18, %p20
    %p22 = pneg %p21
    // Predicated region
    $region2: #{tpu_custom_call.1} parent=1 // pred_check
      _
    $region3: #{tpu_custom_call.1} parent=1 // pred_check_branch
      %24 = sbr.rel (%p21) target = $region5
    $region4: #{tpu_custom_call.1} parent=1 // pred_region
      %s25 = sld [smem:[#allocation3]]
      %s26 = sld [smem:[#allocation3 + $0x1]]
      %s27 = sld [smem:[#allocation3 + $0x2]]
      %s28 = sld [smem:[#allocation3 + $0x3]]
      %s29 = sld [smem:[#allocation3 + $0x4]]
      %s30 = sld [smem:[#allocation3 + $0x5]]
      %s31 = sld [smem:[#allocation3 + $0x6]]
      %s32 = sld [smem:[#allocation3 + $0x7]]
      %s33 = sld [smem:[#allocation3 + $0x8]]
      %s34 = sld [smem:[#allocation3 + $0x9]]
      %s35 = sld [smem:[#allocation3 + $0xa]]
      %s36 = sld [smem:[#allocation3 + $0xb]]
      %s37 = sld [smem:[#allocation3 + $0xc]]
      %s38 = sld [smem:[#allocation3 + $0xd]]
      %s39 = sld [smem:[#allocation3 + $0xe]]
      %s40 = sld [smem:[#allocation3 + $0xf]]
      %s41 = sld [smem:[#allocation3 + $0x10]]
      %s42 = sld [smem:[#allocation3 + $0x11]]
      %s43 = sld [smem:[#allocation3 + $0x12]]
      %s44 = sld [smem:[#allocation3 + $0x13]]
      %v45 = vlaneseq
      %v46 = vshrl.u32 %v45, 7
      %v47 = vstv %s11
      %v48 = vadd.s32 %v46, %v47
      %v49 = vlaneseq
      %v50 = vand.u32 %v49, 127
      %v51 = vstv %s12
      %v52 = vadd.s32 %v50, %v51
      %v53 = vsub.s32 %v48, %v52
      %vm54 = vcmp.lt.s32.totalorder %v53, 0
      %v55 = vsub.s32 0, %v53
      %v56 = vsel %vm54, %v55, %v53
      %vm57 = vcmp.lt.s32.totalorder %v56, 20
      %v58 = vsel %vm57, %v56, 20
      %vm59 = vcmp.eq.s32.totalorder %v58, 0
      %v60 = vstv %s25
      %v61 = vsel %vm59, %v60, %v15
      %vm62 = vcmp.eq.s32.totalorder %v58, 1
      %v63 = vstv %s26
      %v64 = vsel %vm62, %v63, %v61
      %vm65 = vcmp.eq.s32.totalorder %v58, 2
      %v66 = vstv %s27
      %v67 = vsel %vm65, %v66, %v64
      %vm68 = vcmp.eq.s32.totalorder %v58, 3
      %v69 = vstv %s28
      %v70 = vsel %vm68, %v69, %v67
      %vm71 = vcmp.eq.s32.totalorder %v58, 4
      %v72 = vstv %s29
      %v73 = vsel %vm71, %v72, %v70
      %vm74 = vcmp.eq.s32.totalorder %v58, 5
      %v75 = vstv %s30
      %v76 = vsel %vm74, %v75, %v73
      %vm77 = vcmp.eq.s32.totalorder %v58, 6
      %v78 = vstv %s31
      %v79 = vsel %vm77, %v78, %v76
      %vm80 = vcmp.eq.s32.totalorder %v58, 7
      %v81 = vstv %s32
      %v82 = vsel %vm80, %v81, %v79
      %vm83 = vcmp.eq.s32.totalorder %v58, 8
      %v84 = vstv %s33
      %v85 = vsel %vm83, %v84, %v82
      %vm86 = vcmp.eq.s32.totalorder %v58, 9
      %v87 = vstv %s34
      %v88 = vsel %vm86, %v87, %v85
      %vm89 = vcmp.eq.s32.totalorder %v58, 10
      %v90 = vstv %s35
      %v91 = vsel %vm89, %v90, %v88
      %vm92 = vcmp.eq.s32.totalorder %v58, 11
      %v93 = vstv %s36
      %v94 = vsel %vm92, %v93, %v91
      %vm95 = vcmp.eq.s32.totalorder %v58, 12
      %v96 = vstv %s37
      %v97 = vsel %vm95, %v96, %v94
      %vm98 = vcmp.eq.s32.totalorder %v58, 13
      %v99 = vstv %s38
      %v100 = vsel %vm98, %v99, %v97
      %vm101 = vcmp.eq.s32.totalorder %v58, 14
      %v102 = vstv %s39
      %v103 = vsel %vm101, %v102, %v100
      %vm104 = vcmp.eq.s32.totalorder %v58, 15
      %v105 = vstv %s40
      %v106 = vsel %vm104, %v105, %v103
      %vm107 = vcmp.eq.s32.totalorder %v58, 16
      %v108 = vstv %s41
      %v109 = vsel %vm107, %v108, %v106
      %vm110 = vcmp.eq.s32.totalorder %v58, 17
      %v111 = vstv %s42
      %v112 = vsel %vm110, %v111, %v109
      %vm113 = vcmp.eq.s32.totalorder %v58, 18
      %v114 = vstv %s43
      %v115 = vsel %vm113, %v114, %v112
      %vm116 = vcmp.eq.s32.totalorder %v58, 19
      %v117 = vstv %s44
      %v118 = vsel %vm116, %v117, %v115
      %119 = vst [vmem:[#allocation4] sm:$0xff] %v118
    $region5: #{tpu_custom_call.1} parent=1 // pred_fallthru
      _
    // Predicated region
    $region6: #{tpu_custom_call.1} parent=1 // pred_check
      _
    $region7: #{tpu_custom_call.1} parent=1 // pred_check_branch
      %121 = sbr.rel (0) target = $region9
    $region8: #{tpu_custom_call.1} parent=1 // pred_region
      %s123 = ssub.s32 128, 128
      %124 = vsyncadd [#allocation5], %s123
      %s126 = sshll.u32 [#allocation4], 4
      %s127 = int_to_ptr.vmem [resolvable:$true] %s126
      %129 = dma.vmem_to_hbm [thread:$0]  %s127, 128, %s1, [#allocation5]
    $region9: #{tpu_custom_call.1} parent=1 // pred_fallthru
      _
    // Predicated region
    $region10: #{tpu_custom_call.1} parent=1 // pred_check
      _
    $region11: #{tpu_custom_call.1} parent=1 // pred_check_branch
      %131 = sbr.rel (0) target = $region13
    $region12: #{tpu_custom_call.1} parent=1 // pred_region
      %132 = dma.done [#allocation5], 128
    $region13: #{tpu_custom_call.1} parent=1 // pred_fallthru
      _
    %133 = vsyncpa [#allocation5], 1

</llo_original>
